<compile_context>
chip_gen: v6e
topology: v6e:2x2x1
jax: 0.10.0
libtpu: 0.0.40
codegen_flags: <defaults>
</compile_context>

<pallas_src>
import jax
import jax.numpy as jnp
from jax.experimental import pallas as pl
from jax.experimental.pallas import tpu as pltpu


# --------------------------------------------------------------------------
# One-time weight preprocessing (NOT in the per-call path)
# --------------------------------------------------------------------------
def conv7x7_as_matrices(w, H, W):
    """7x7 conv (cross-correlation, pad=3, no bias) as two dense (HW, HW)
    operators acting on the flattened spatial axis:
        conv_out_flat = cmax_flat @ Km + cavg_flat @ Ka
    w: (1, 2, 7, 7) OIHW."""
    ii = jnp.arange(H).reshape(H, 1, 1, 1)     # stats row
    jj = jnp.arange(W).reshape(1, W, 1, 1)     # stats col
    oi = jnp.arange(H).reshape(1, 1, H, 1)     # output row
    oj = jnp.arange(W).reshape(1, 1, 1, W)     # output col
    kh = ii - oi + 3
    kw = jj - oj + 3
    valid = (kh >= 0) & (kh < 7) & (kw >= 0) & (kw < 7)
    khc = jnp.clip(kh, 0, 6)
    kwc = jnp.clip(kw, 0, 6)
    taps = w[0][:, khc, kwc]                   # (2, H, W, H, W)
    m = jnp.where(valid[None], taps, 0.0).reshape(2, H * W, H * W)
    return m[0], m[1]


def prepare_actor_params(p, input_shape):
    """Build the kernel's weight operands once:
       * kma : merged SAM conv operator (2*HW, HW)
       * w1i : layer_1 rows for the flattened image features (C, HW, Hd)
       * slab: all small 2-D params packed into one 8x128-aligned f32 slab."""
    C, H, W = input_shape
    HW = H * W
    Cr = p["cam_w1"].shape[1]
    Hd = p["w2"].shape[0]
    A = p["w3"].shape[1]
    SD = p["w1"].shape[0] - C * HW

    km, ka = conv7x7_as_matrices(p["sam_w"], H, W)
    kma = jnp.concatenate([km, ka], axis=0)              # (2*HW, HW)
    w1i = p["w1"][:C * HW].reshape(C, HW, Hd)            # (C, HW, Hd)
    w1s = p["w1"][C * HW:]                                # (SD, Hd)

    small = [
        ("cw1t", jnp.asarray(p["cam_w1"]).T),             # (Cr, C)  transposed CAM fc1
        ("cb1",  jnp.asarray(p["cam_b1"]).reshape(-1, 1)),# (Cr, 1)
        ("cw2t", jnp.asarray(p["cam_w2"]).T),             # (C, Cr)  transposed CAM fc2
        ("cb2",  jnp.asarray(p["cam_b2"]).reshape(-1, 1)),# (C, 1)
        ("w1s",  w1s),                                    # (SD, Hd)
        ("b1",   jnp.asarray(p["b1"]).reshape(1, -1)),    # (1, Hd)
        ("w2",   p["w2"]),                                # (Hd, Hd)
        ("b2",   jnp.asarray(p["b2"]).reshape(1, -1)),    # (1, Hd)
        ("w3",   p["w3"]),                                # (Hd, A)
        ("b3",   jnp.asarray(p["b3"]).reshape(1, -1)),    # (1, A)
    ]
    # Each sub-tensor starts on an 8-sublane boundary so in-kernel slices are free.
    off, row = {}, 0
    for name, arr in small:
        off[name] = row
        row += ((arr.shape[0] + 7) // 8) * 8
    rows = max(((row + 7) // 8) * 8, 8)
    slab = jnp.zeros((rows, 128), jnp.float32)
    for name, arr in small:
        r, c = arr.shape
        slab = slab.at[off[name]:off[name] + r, 0:c].set(arr.astype(jnp.float32))

    arrays = {"kma": kma.astype(jnp.float32),
              "w1i": w1i.astype(jnp.float32),
              "slab": slab}
    meta = dict(C=C, HW=HW, Cr=Cr, Hd=Hd, A=A, SD=SD, off=off)
    return arrays, meta


# --------------------------------------------------------------------------
# Fused Actor forward kernel + wrapper factory
# --------------------------------------------------------------------------
def make_actor_forward(meta, batch):
    C, HW, Cr, Hd, A, SD = (meta[k] for k in ("C", "HW", "Cr", "Hd", "A", "SD"))
    off = meta["off"]
    B = batch

    def kernel(xt_ref, sa_ref, kma_ref, w1i_ref, slab_ref, o_ref):
        x = xt_ref[...]                                    # (C, B, HW) channel-major

        # -------- CAM: channel attention (max||avg stacked -> one MLP pass) -----
        mx = jnp.max(x, axis=-1)                           # (C, B) adaptive max pool
        av = jnp.mean(x, axis=-1)                          # (C, B) adaptive avg pool
        stats = jnp.concatenate([mx, av], axis=-1)         # (C, 2B)
        cw1t = slab_ref[off["cw1t"]:off["cw1t"] + Cr, 0:C]
        cb1 = slab_ref[off["cb1"]:off["cb1"] + Cr, 0:1]
        cw2t = slab_ref[off["cw2t"]:off["cw2t"] + C, 0:Cr]
        cb2 = slab_ref[off["cb2"]:off["cb2"] + C, 0:1]
        h = jnp.maximum(
            jnp.dot(cw1t, stats, preferred_element_type=jnp.float32) + cb1, 0.0)
        z = jnp.dot(cw2t, h, preferred_element_type=jnp.float32) + cb2    # (C, 2B)
        att = jax.nn.sigmoid(z[:, :B] + z[:, B:])          # (C, B)
        y = x * att[:, :, None]                            # (C, B, HW)

        # -------- SAM: 7x7 conv as ONE (B, 2HW) @ (2HW, HW) MXU dot -------------
        cmax = jnp.max(y, axis=0)                          # (B, HW) channel max
        cavg = jnp.mean(y, axis=0)                         # (B, HW) channel mean
        cmca = jnp.concatenate([cmax, cavg], axis=-1)      # (B, 2HW)  K = 2*HW
        conv = jnp.dot(cmca, kma_ref[...],
                       preferred_element_type=jnp.float32)  # (B, HW)
        cbam = y * conv[None, :, :]                         # (C, B, HW)

        # -------- Actor MLP head -------------------------------------------------
        # Image features: one batched matmul over channels + major-axis sum
        # (replaces 6 serially-accumulated (B,HW)x(HW,Hd) dots).
        part = jnp.einsum("cbp,cph->cbh", cbam, w1i_ref[...],
                          preferred_element_type=jnp.float32)   # (C, B, Hd)
        h_img = jnp.sum(part, axis=0)                       # (B, Hd)

        w1s = slab_ref[off["w1s"]:off["w1s"] + SD, 0:Hd]
        b1 = slab_ref[off["b1"]:off["b1"] + 1, 0:Hd]
        w2 = slab_ref[off["w2"]:off["w2"] + Hd, 0:Hd]
        b2 = slab_ref[off["b2"]:off["b2"] + 1, 0:Hd]
        w3 = slab_ref[off["w3"]:off["w3"] + Hd, 0:A]
        b3 = slab_ref[off["b3"]:off["b3"] + 1, 0:A]

        h1 = jnp.maximum(
            h_img + jnp.dot(sa_ref[...], w1s, preferred_element_type=jnp.float32) + b1,
            0.0)
        h2 = jnp.maximum(
            jnp.dot(h1, w2, preferred_element_type=jnp.float32) + b2, 0.0)
        o_ref[...] = jnp.tanh(
            jnp.dot(h2, w3, preferred_element_type=jnp.float32) + b3)

    flops = (2 * Cr * C * 2 * B + 2 * C * Cr * 2 * B       # CAM shared MLP
             + 2 * B * 2 * HW * HW                          # SAM conv-as-matmul
             + 2 * C * B * HW * Hd                          # head image contraction
             + 2 * B * SD * Hd + 2 * B * Hd * Hd + 2 * B * Hd * A)

    def forward(s, s_a, arrays):
        b, c, hh, ww = s.shape
        # Channel-major layout so all in-kernel reductions/matmuls are layout-friendly.
        xt = jnp.transpose(s.reshape(b, c, hh * ww), (1, 0, 2))     # (C, B, HW)
        bytes_accessed = 4 * (xt.size + s_a.size + arrays["kma"].size
                              + arrays["w1i"].size + arrays["slab"].size + B * A)
        vmem_spec = lambda: pl.BlockSpec(memory_space=pltpu.MemorySpace.VMEM)
        return pl.pallas_call(
            kernel,
            out_shape=jax.ShapeDtypeStruct((B, A), jnp.float32),
            in_specs=[vmem_spec() for _ in range(5)],
            out_specs=vmem_spec(),
            cost_estimate=pl.CostEstimate(
                flops=flops,
                transcendentals=B * (2 * C + A),
                bytes_accessed=bytes_accessed),
        )(xt, s_a, arrays["kma"], arrays["w1i"], arrays["slab"])

    return forward


# --------------------------------------------------------------------------
# Pure-JAX reference (matches the PyTorch Actor forward)
# --------------------------------------------------------------------------
def actor_reference(s, s_a, p):
    B, C, H, W = s.shape
    mx = jnp.max(s, axis=(2, 3))
    av = jnp.mean(s, axis=(2, 3))

    def mlp(v):
        h = jnp.maximum(v @ p["cam_w1"] + p["cam_b1"], 0.0)
        return h @ p["cam_w2"] + p["cam_b2"]

    att = jax.nn.sigmoid(mlp(mx) + mlp(av))
    y = s * att[:, :, None, None]

    cmax = jnp.max(y, axis=1, keepdims=True)
    cavg = jnp.mean(y, axis=1, keepdims=True)
    cc = jnp.concatenate([cmax, cavg], axis=1)
    conv = jax.lax.conv_general_dilated(
        cc, p["sam_w"], window_strides=(1, 1), padding=((3, 3), (3, 3)),
        dimension_numbers=("NCHW", "OIHW", "NCHW"))
    cbam_out = conv * y

    feats = jnp.concatenate([cbam_out.reshape(B, -1), s_a], axis=1)
    h1 = jnp.maximum(feats @ p["w1"] + p["b1"], 0.0)
    h2 = jnp.maximum(h1 @ p["w2"] + p["b2"], 0.0)
    return jnp.tanh(h2 @ p["w3"] + p["b3"])


if __name__ == "__main__":
    # Module hyper-params (small shapes consistent with Actor.__init__)
    input_shape = (6, 8, 8)        # (C, H, W); r=3 -> C//r = 2
    state_dim, action_dim, hidden_dim = 8, 4, 32
    B = 2
    C, H, W = input_shape
    Cr = C // 3
    in_dim = C * H * W + state_dim

    key = jax.random.PRNGKey(0)
    ks = jax.random.split(key, 12)
    sc = 0.1
    params = {
        "cam_w1": sc * jax.random.normal(ks[0], (C, Cr), jnp.float32),
        "cam_b1": sc * jax.random.normal(ks[1], (1, Cr), jnp.float32),
        "cam_w2": sc * jax.random.normal(ks[2], (Cr, C), jnp.float32),
        "cam_b2": sc * jax.random.normal(ks[3], (1, C), jnp.float32),
        "sam_w": sc * jax.random.normal(ks[4], (1, 2, 7, 7), jnp.float32),  # Conv2d(2->1,7x7,bias=False)
        "w1": sc * jax.random.normal(ks[5], (in_dim, hidden_dim), jnp.float32),
        "b1": sc * jax.random.normal(ks[6], (1, hidden_dim), jnp.float32),
        "w2": sc * jax.random.normal(ks[7], (hidden_dim, hidden_dim), jnp.float32),
        "b2": sc * jax.random.normal(ks[8], (1, hidden_dim), jnp.float32),
        "w3": sc * jax.random.normal(ks[9], (hidden_dim, action_dim), jnp.float32),
        "b3": sc * jax.random.normal(ks[10], (1, action_dim), jnp.float32),
    }

    s = jax.random.normal(ks[11], (B, C, H, W), jnp.float32)
    s_a = jax.random.normal(jax.random.PRNGKey(1), (B, state_dim), jnp.float32)

    # One-time weight preprocessing (outside the per-call path).
    arrays, meta = prepare_actor_params(params, input_shape)
    fwd = jax.jit(make_actor_forward(meta, B))

    out = jax.block_until_ready(fwd(s, s_a, arrays))

    ref = actor_reference(s, s_a, params)
    assert out.shape == (B, action_dim)
    err = float(jnp.max(jnp.abs(out - ref)))
    assert jnp.allclose(out, ref, atol=2e-3, rtol=2e-3), f"mismatch: max abs err {err}"

    print("KERNEL_OK")
</pallas_src>

<mosaic_0001>
module attributes {stable_mosaic.version = 11 : i64} {
  func.func @kernel(%arg0: memref<6x2x64xf32, #tpu.memory_space<vmem>>, %arg1: memref<2x8xf32, #tpu.memory_space<vmem>>, %arg2: memref<128x64xf32, #tpu.memory_space<vmem>>, %arg3: memref<6x64x32xf32, #tpu.memory_space<vmem>>, %arg4: memref<128x128xf32, #tpu.memory_space<vmem>>, %arg5: memref<2x4xf32, #tpu.memory_space<vmem>>) attributes {dimension_semantics = [], scalar_prefetch = 0 : i64, scratch_operands = 0 : i64, tpu.core_type = #tpu.core_type<tc>} {
    %c0 = arith.constant 0 : index
    %c0_0 = arith.constant 0 : index
    %c0_1 = arith.constant 0 : index
    %0 = vector.load %arg0[%c0, %c0_0, %c0_1] : memref<6x2x64xf32, #tpu.memory_space<vmem>>, vector<6x2x64xf32>
    %cst = arith.constant dense<0xFF800000> : vector<6x2xf32>
    %1 = vector.multi_reduction <maximumf>, %0, %cst [2] : vector<6x2x64xf32> to vector<6x2xf32>
    %cst_2 = arith.constant dense<0.000000e+00> : vector<6x2xf32>
    %2 = vector.multi_reduction <add>, %0, %cst_2 [2] : vector<6x2x64xf32> to vector<6x2xf32>
    %cst_3 = arith.constant 6.400000e+01 : f32
    %3 = vector.broadcast %cst_3 : f32 to vector<6x2xf32>
    %4 = arith.divf %2, %3 : vector<6x2xf32>
    %5 = tpu.concatenate %1, %4 in 1 : vector<6x2xf32>, vector<6x2xf32> -> vector<6x4xf32>
    %c0_4 = arith.constant 0 : index
    %c0_5 = arith.constant 0 : index
    %6 = vector.load %arg4[%c0_4, %c0_5] : memref<128x128xf32, #tpu.memory_space<vmem>>, vector<2x6xf32>
    %c8 = arith.constant 8 : index
    %c0_6 = arith.constant 0 : index
    %7 = vector.load %arg4[%c8, %c0_6] : memref<128x128xf32, #tpu.memory_space<vmem>>, vector<2x1xf32>
    %c16 = arith.constant 16 : index
    %c0_7 = arith.constant 0 : index
    %8 = vector.load %arg4[%c16, %c0_7] : memref<128x128xf32, #tpu.memory_space<vmem>>, vector<6x2xf32>
    %c24 = arith.constant 24 : index
    %c0_8 = arith.constant 0 : index
    %9 = vector.load %arg4[%c24, %c0_8] : memref<128x128xf32, #tpu.memory_space<vmem>>, vector<6x1xf32>
    %cst_9 = arith.constant dense<0.000000e+00> : vector<2x4xf32>
    %10 = tpu.matmul %6, %5, %cst_9 {dimension_numbers = #tpu.dot_dimension_numbers<[1], [0], [0], [1], [0, 0, 1, 1], [], []>} : vector<2x6xf32>, vector<6x4xf32>, vector<2x4xf32> -> vector<2x4xf32>
    %11 = vector.broadcast %7 : vector<2x1xf32> to vector<2x4xf32>
    %12 = arith.addf %10, %11 : vector<2x4xf32>
    %cst_10 = arith.constant 0.000000e+00 : f32
    %13 = vector.broadcast %cst_10 : f32 to vector<2x4xf32>
    %14 = arith.maximumf %12, %13 : vector<2x4xf32>
    %cst_11 = arith.constant dense<0.000000e+00> : vector<6x4xf32>
    %15 = tpu.matmul %8, %14, %cst_11 {dimension_numbers = #tpu.dot_dimension_numbers<[1], [0], [0], [1], [0, 0, 1, 1], [], []>} : vector<6x2xf32>, vector<2x4xf32>, vector<6x4xf32> -> vector<6x4xf32>
    %16 = vector.broadcast %9 : vector<6x1xf32> to vector<6x4xf32>
    %17 = arith.addf %15, %16 : vector<6x4xf32>
    %18 = vector.extract_strided_slice %17 {offsets = [0, 0], sizes = [6, 2], strides = [1, 1]} : vector<6x4xf32> to vector<6x2xf32>
    %19 = vector.extract_strided_slice %17 {offsets = [0, 2], sizes = [6, 2], strides = [1, 1]} : vector<6x4xf32> to vector<6x2xf32>
    %20 = arith.addf %18, %19 : vector<6x2xf32>
    %21 = arith.negf %20 : vector<6x2xf32>
    %22 = math.exp %21 : vector<6x2xf32>
    %cst_12 = arith.constant 1.000000e+00 : f32
    %23 = vector.broadcast %cst_12 : f32 to vector<6x2xf32>
    %24 = arith.addf %23, %22 : vector<6x2xf32>
    %25 = arith.divf %23, %24 : vector<6x2xf32>
    %26 = vector.shape_cast %25 : vector<6x2xf32> to vector<6x2x1xf32>
    %27 = vector.broadcast %26 : vector<6x2x1xf32> to vector<6x2x64xf32>
    %28 = arith.mulf %0, %27 : vector<6x2x64xf32>
    %cst_13 = arith.constant dense<0xFF800000> : vector<2x64xf32>
    %29 = vector.multi_reduction <maximumf>, %28, %cst_13 [0] : vector<6x2x64xf32> to vector<2x64xf32>
    %cst_14 = arith.constant dense<0.000000e+00> : vector<2x64xf32>
    %30 = vector.multi_reduction <add>, %28, %cst_14 [0] : vector<6x2x64xf32> to vector<2x64xf32>
    %cst_15 = arith.constant 6.000000e+00 : f32
    %31 = vector.broadcast %cst_15 : f32 to vector<2x64xf32>
    %32 = arith.divf %30, %31 : vector<2x64xf32>
    %33 = tpu.concatenate %29, %32 in 1 : vector<2x64xf32>, vector<2x64xf32> -> vector<2x128xf32>
    %c0_16 = arith.constant 0 : index
    %c0_17 = arith.constant 0 : index
    %34 = vector.load %arg2[%c0_16, %c0_17] : memref<128x64xf32, #tpu.memory_space<vmem>>, vector<128x64xf32>
    %cst_18 = arith.constant dense<0.000000e+00> : vector<2x64xf32>
    %35 = tpu.matmul %33, %34, %cst_18 {dimension_numbers = #tpu.dot_dimension_numbers<[1], [0], [0], [1], [0, 0, 1, 1], [], []>} : vector<2x128xf32>, vector<128x64xf32>, vector<2x64xf32> -> vector<2x64xf32>
    %36 = vector.shape_cast %35 : vector<2x64xf32> to vector<1x2x64xf32>
    %37 = vector.broadcast %36 : vector<1x2x64xf32> to vector<6x2x64xf32>
    %38 = arith.mulf %28, %37 : vector<6x2x64xf32>
    %c0_19 = arith.constant 0 : index
    %c0_20 = arith.constant 0 : index
    %c0_21 = arith.constant 0 : index
    %39 = vector.load %arg3[%c0_19, %c0_20, %c0_21] : memref<6x64x32xf32, #tpu.memory_space<vmem>>, vector<6x64x32xf32>
    "tpu.trace_start"() <{level = 10 : i32, message = "cbp,cph->cbh"}> : () -> ()
    %cst_22 = arith.constant dense<0.000000e+00> : vector<6x2x32xf32>
    %40 = tpu.matmul %38, %39, %cst_22 {dimension_numbers = #tpu.dot_dimension_numbers<[2], [1], [1], [2], [0, 0, 0, 1, 1, 2], [0], [0]>} : vector<6x2x64xf32>, vector<6x64x32xf32>, vector<6x2x32xf32> -> vector<6x2x32xf32>
    "tpu.trace_stop"() : () -> ()
    %cst_23 = arith.constant dense<0.000000e+00> : vector<2x32xf32>
    %41 = vector.multi_reduction <add>, %40, %cst_23 [0] : vector<6x2x32xf32> to vector<2x32xf32>
    %c32 = arith.constant 32 : index
    %c0_24 = arith.constant 0 : index
    %42 = vector.load %arg4[%c32, %c0_24] : memref<128x128xf32, #tpu.memory_space<vmem>>, vector<8x32xf32>
    %c40 = arith.constant 40 : index
    %c0_25 = arith.constant 0 : index
    %43 = vector.load %arg4[%c40, %c0_25] : memref<128x128xf32, #tpu.memory_space<vmem>>, vector<1x32xf32>
    %c48 = arith.constant 48 : index
    %c0_26 = arith.constant 0 : index
    %44 = vector.load %arg4[%c48, %c0_26] : memref<128x128xf32, #tpu.memory_space<vmem>>, vector<32x32xf32>
    %c80 = arith.constant 80 : index
    %c0_27 = arith.constant 0 : index
    %45 = vector.load %arg4[%c80, %c0_27] : memref<128x128xf32, #tpu.memory_space<vmem>>, vector<1x32xf32>
    %c88 = arith.constant 88 : index
    %c0_28 = arith.constant 0 : index
    %46 = vector.load %arg4[%c88, %c0_28] : memref<128x128xf32, #tpu.memory_space<vmem>>, vector<32x4xf32>
    %c120 = arith.constant 120 : index
    %c0_29 = arith.constant 0 : index
    %47 = vector.load %arg4[%c120, %c0_29] : memref<128x128xf32, #tpu.memory_space<vmem>>, vector<1x4xf32>
    %c0_30 = arith.constant 0 : index
    %c0_31 = arith.constant 0 : index
    %48 = vector.load %arg1[%c0_30, %c0_31] : memref<2x8xf32, #tpu.memory_space<vmem>>, vector<2x8xf32>
    %cst_32 = arith.constant dense<0.000000e+00> : vector<2x32xf32>
    %49 = tpu.matmul %48, %42, %cst_32 {dimension_numbers = #tpu.dot_dimension_numbers<[1], [0], [0], [1], [0, 0, 1, 1], [], []>} : vector<2x8xf32>, vector<8x32xf32>, vector<2x32xf32> -> vector<2x32xf32>
    %50 = arith.addf %41, %49 : vector<2x32xf32>
    %51 = vector.broadcast %43 : vector<1x32xf32> to vector<2x32xf32>
    %52 = arith.addf %50, %51 : vector<2x32xf32>
    %cst_33 = arith.constant 0.000000e+00 : f32
    %53 = vector.broadcast %cst_33 : f32 to vector<2x32xf32>
    %54 = arith.maximumf %52, %53 : vector<2x32xf32>
    %cst_34 = arith.constant dense<0.000000e+00> : vector<2x32xf32>
    %55 = tpu.matmul %54, %44, %cst_34 {dimension_numbers = #tpu.dot_dimension_numbers<[1], [0], [0], [1], [0, 0, 1, 1], [], []>} : vector<2x32xf32>, vector<32x32xf32>, vector<2x32xf32> -> vector<2x32xf32>
    %56 = vector.broadcast %45 : vector<1x32xf32> to vector<2x32xf32>
    %57 = arith.addf %55, %56 : vector<2x32xf32>
    %cst_35 = arith.constant 0.000000e+00 : f32
    %58 = vector.broadcast %cst_35 : f32 to vector<2x32xf32>
    %59 = arith.maximumf %57, %58 : vector<2x32xf32>
    %cst_36 = arith.constant dense<0.000000e+00> : vector<2x4xf32>
    %60 = tpu.matmul %59, %46, %cst_36 {dimension_numbers = #tpu.dot_dimension_numbers<[1], [0], [0], [1], [0, 0, 1, 1], [], []>} : vector<2x32xf32>, vector<32x4xf32>, vector<2x4xf32> -> vector<2x4xf32>
    %61 = vector.broadcast %47 : vector<1x4xf32> to vector<2x4xf32>
    %62 = arith.addf %60, %61 : vector<2x4xf32>
    %63 = math.tanh %62 : vector<2x4xf32>
    %c0_37 = arith.constant 0 : index
    %c0_38 = arith.constant 0 : index
    %64 = vector.load %arg5[%c0_37, %c0_38] : memref<2x4xf32, #tpu.memory_space<vmem>>, vector<2x4xf32>
    tpu.vector_store %arg5[%c0_37, %c0_38], %63 {strides = array<i32>} : memref<2x4xf32, #tpu.memory_space<vmem>>, vector<2x4xf32>,
    return
  }
}

</mosaic_0001>

<llo_original>
// kernel: forward.1
$region0: #{forward.1}
  #allocation0 [shape = 'u32[]', space=smem, size = 0x4, offset = 0x4, fixed_abs, tag = 'smem constant byte address 0x4 - core index']
  #allocation1 [shape = 'u32[144,128]{1,0:T(1,128)}', space=vmem, size = 0x12000, scoped, tag = 'internal scratch']
  %s0 = inlined_call_operand.vmem [shape: f32[6,2,64], index: 0, kind: input, shape index: {}]
  %s1 = inlined_call_operand.vmem [shape: f32[2,8], index: 1, kind: input, shape index: {}]
  %s2 = inlined_call_operand.vmem [shape: f32[128,64], index: 2, kind: input, shape index: {}]
  %s3 = inlined_call_operand.vmem [shape: f32[6,64,32], index: 3, kind: input, shape index: {}]
  %s4 = inlined_call_operand.vmem [shape: f32[128,128], index: 4, kind: input, shape index: {}]
  %s5 = inlined_call_operand.hbm [shape: f32[2,4], index: 5, kind: output, shape index: {}]
  %s6 = sld [smem:[#allocation0]]
  $region30: #{forward.1} parent=0
    _
  %s8 = ssub.s32 1, %s6
  %s9 = scalar_select 0, %s8, %s6
  $region1: #{forward.1} parent=0
    #allocation2 [shape = 'u8[1024]{0}', space=vmem, size = 0x400, scoped, tag = 'output window, operand 0, single buffered']
    #allocation3 [shape = 's32[1]{0}', space=sflag, size = 0x4, scoped, tag = 'scoped memory for forward.1']
    %10 = vsyncpa [#allocation3], 0
    // Predicated region
    $region2: #{forward.1} parent=1 // pred_check
      _
    $region3: #{forward.1} parent=1 // pred_check_branch
      %12 = sbr.rel (0) target = $region5
    $region4: #{forward.1} parent=1 // pred_region
      _
    $region5: #{forward.1} parent=1 // pred_fallthru
      _
    // Predicated region
    $region6: #{forward.1} parent=1 // pred_check
      _
    $region7: #{forward.1} parent=1 // pred_check_branch
      %14 = sbr.rel (0) target = $region9
    $region8: #{forward.1} parent=1 // pred_region
      _
    $region9: #{forward.1} parent=1 // pred_fallthru
      _
    // Predicated region
    $region10: #{forward.1} parent=1 // pred_check
      _
    $region11: #{forward.1} parent=1 // pred_check_branch
      %16 = sbr.rel (0) target = $region13
    $region12: #{forward.1} parent=1 // pred_region
      _
    $region13: #{forward.1} parent=1 // pred_fallthru
      _
    // Predicated region
    $region14: #{forward.1} parent=1 // pred_check
      _
    $region15: #{forward.1} parent=1 // pred_check_branch
      %18 = sbr.rel (0) target = $region17
    $region16: #{forward.1} parent=1 // pred_region
      _
    $region17: #{forward.1} parent=1 // pred_fallthru
      _
    // Predicated region
    $region18: #{forward.1} parent=1 // pred_check
      _
    $region19: #{forward.1} parent=1 // pred_check_branch
      %20 = sbr.rel (0) target = $region21
    $region20: #{forward.1} parent=1 // pred_region
      _
    $region21: #{forward.1} parent=1 // pred_fallthru
      _
    %v21 = vld [vmem:[%s0] sm:$0x3]
    %v22 = vld [vmem:[%s0 + $0x2] sm:$0x3]
    %v23 = vld [vmem:[%s0 + $0x4] sm:$0x3]
    %v24 = vld [vmem:[%s0 + $0x6] sm:$0x3]
    %v25 = vld [vmem:[%s0 + $0x8] sm:$0x3]
    %v26 = vld [vmem:[%s0 + $0xa] sm:$0x3]
    %vm27 = vcmask 517120
    %v28 = vsel %vm27, %v21, -inf
    %29 = vmax.xlane.f32.xlu0 %v28
    %v30 = vpop.xlane.xlu0 %29
    %v31 = vsel %vm27, %v22, -inf
    %32 = vmax.xlane.f32.xlu0 %v31
    %v33 = vpop.xlane.xlu0 %32
    %v34 = vsel %vm27, %v23, -inf
    %35 = vmax.xlane.f32.xlu0 %v34
    %v36 = vpop.xlane.xlu0 %35
    %v37 = vsel %vm27, %v24, -inf
    %38 = vmax.xlane.f32.xlu0 %v37
    %v39 = vpop.xlane.xlu0 %38
    %v40 = vsel %vm27, %v25, -inf
    %41 = vmax.xlane.f32.xlu0 %v40
    %v42 = vpop.xlane.xlu0 %41
    %v43 = vsel %vm27, %v26, -inf
    %44 = vmax.xlane.f32.xlu0 %v43
    %v45 = vpop.xlane.xlu0 %44
    %v46 = vsel %vm27, %v21, 0.0
    %47 = vadd.xlane.f32.xlu0 %v46
    %v48 = vpop.xlane.xlu0 %47
    %v49 = vsel %vm27, %v22, 0.0
    %50 = vadd.xlane.f32.xlu0 %v49
    %v51 = vpop.xlane.xlu0 %50
    %v52 = vsel %vm27, %v23, 0.0
    %53 = vadd.xlane.f32.xlu0 %v52
    %v54 = vpop.xlane.xlu0 %53
    %v55 = vsel %vm27, %v24, 0.0
    %56 = vadd.xlane.f32.xlu0 %v55
    %v57 = vpop.xlane.xlu0 %56
    %v58 = vsel %vm27, %v25, 0.0
    %59 = vadd.xlane.f32.xlu0 %v58
    %v60 = vpop.xlane.xlu0 %59
    %v61 = vsel %vm27, %v26, 0.0
    %62 = vadd.xlane.f32.xlu0 %v61
    %v63 = vpop.xlane.xlu0 %62
    %v64 = vrcp.pop 64.0
    %v65 = vmul.f32 %v48, %v64
    %v66 = vmul.f32 %v51, %v64
    %v67 = vmul.f32 %v54, %v64
    %v68 = vmul.f32 %v57, %v64
    %v69 = vmul.f32 %v60, %v64
    %v70 = vmul.f32 %v63, %v64
    %v77 = vlaneseq
    %v78 = vand.u32 %v77, 127
    %v79 = vlaneseq
    %v80 = vshrl.u32 %v79, 7
    %v81 = vsub.s32 %v78, %v80
    %v82 = vrot.slane %v30, %v81
    %v83 = vlaneseq
    %v84 = vshrl.u32 %v83, 7
    %v85 = vsub.s32 %v78, %v84
    %v86 = vrot.slane %v33, %v85
    %v87 = vlaneseq
    %v88 = vshrl.u32 %v87, 7
    %v89 = vsub.s32 %v78, %v88
    %v90 = vrot.slane %v36, %v89
    %v91 = vlaneseq
    %v92 = vshrl.u32 %v91, 7
    %v93 = vsub.s32 %v78, %v92
    %v94 = vrot.slane %v39, %v93
    %v95 = vlaneseq
    %v96 = vshrl.u32 %v95, 7
    %v97 = vsub.s32 %v78, %v96
    %v98 = vrot.slane %v42, %v97
    %v99 = vlaneseq
    %v100 = vshrl.u32 %v99, 7
    %v101 = vsub.s32 %v78, %v100
    %v102 = vrot.slane %v45, %v101
    %vm103 = vcmask 1041409
    %v104 = vsel %vm103, %v86, %v82
    %vm105 = vcmask 1042434
    %v106 = vsel %vm105, %v90, %v104
    %vm107 = vcmask 1043459
    %v108 = vsel %vm107, %v94, %v106
    %vm109 = vcmask 1044484
    %v110 = vsel %vm109, %v98, %v108
    %vm111 = vcmask 1045509
    %v112 = vsel %vm111, %v102, %v110
    %v120 = vadd.s32 %v78, 4294967294
    %v121 = vlaneseq
    %v122 = vshrl.u32 %v121, 7
    %v123 = vsub.s32 %v120, %v122
    %v124 = vrot.slane %v65, %v123
    %v125 = vlaneseq
    %v126 = vshrl.u32 %v125, 7
    %v127 = vsub.s32 %v120, %v126
    %v128 = vrot.slane %v66, %v127
    %v129 = vlaneseq
    %v130 = vshrl.u32 %v129, 7
    %v131 = vsub.s32 %v120, %v130
    %v132 = vrot.slane %v67, %v131
    %v133 = vlaneseq
    %v134 = vshrl.u32 %v133, 7
    %v135 = vsub.s32 %v120, %v134
    %v136 = vrot.slane %v68, %v135
    %v137 = vlaneseq
    %v138 = vshrl.u32 %v137, 7
    %v139 = vsub.s32 %v120, %v138
    %v140 = vrot.slane %v69, %v139
    %v141 = vlaneseq
    %v142 = vshrl.u32 %v141, 7
    %v143 = vsub.s32 %v120, %v142
    %v144 = vrot.slane %v70, %v143
    %v145 = vsel %vm103, %v128, %v124
    %v146 = vsel %vm105, %v132, %v145
    %v147 = vsel %vm107, %v136, %v146
    %v148 = vsel %vm109, %v140, %v147
    %v149 = vsel %vm111, %v144, %v148
    %vm151 = vcmask 15360
    %v152 = vsel %vm151, %v112, %v149
    %v153 = vld [vmem:[%s4] sm:$0x3]
    %v154 = vld [vmem:[%s4 + $0x8] sm:$0x3]
    %v155 = vld [vmem:[%s4 + $0x10] sm:$0x3f]
    %v156 = vld [vmem:[%s4 + $0x18] sm:$0x3f]
    %158 = vset.pattern.permute.xlu0 0
    %159 = vperm.xlu0 %158, %v154
    %v160 = vpop.permute.xlu0 %159
    %vm162 = vcmask 48128
    %v164 = vsel %vm162, %v153, 0
    %vm166 = vcmask 1045504
    %v168 = vsel %vm166, %v152, 0
    %170 = vmatprep.subr.mxu0 0.0
    %171 = vmatpush1.msra.mxu0 0.0
    %172 = vmatprep.subr.mxu0 0.0
    %173 = vmatpush1.msra.mxu0 0.0
    %174 = vmatprep.subr.mxu0 0.0
    %175 = vmatpush1.msra.mxu0 0.0
    %176 = vmatprep.subr.mxu0 0.0
    %177 = vmatpush1.msra.mxu0 0.0
    %178 = vmatprep.subr.mxu0 0.0
    %179 = vmatpush1.msra.mxu0 0.0
    %180 = vmatprep.subr.mxu0 0.0
    %181 = vmatpush1.msra.mxu0 0.0
    %182 = vmatprep.subr.mxu0 0.0
    %183 = vmatpush1.msra.mxu0 0.0
    %184 = vmatprep.subr.mxu0 0.0
    %185 = vmatpush1.msra.mxu0 0.0
    %186 = vmatprep.subr.mxu0 0.0
    %187 = vmatpush1.msra.mxu0 0.0
    %188 = vmatprep.subr.mxu0 0.0
    %189 = vmatpush1.msra.mxu0 0.0
    %190 = vmatprep.subr.mxu0 0.0
    %191 = vmatpush1.msra.mxu0 0.0
    %192 = vmatprep.subr.mxu0 0.0
    %193 = vmatpush1.msra.mxu0 0.0
    %194 = vmatprep.subr.mxu0 0.0
    %195 = vmatpush1.msra.mxu0 0.0
    %196 = vmatprep.subr.mxu0 0.0
    %197 = vmatpush1.msra.mxu0 0.0
    %198 = vmatprep.subr.mxu0 0.0
    %199 = vmatpush1.msra.mxu0 0.0
    %200 = vmatprep.subr.mxu0 0.0
    %201 = vmatpush1.msra.mxu0 %v168
    %202 = vmatprep.subr.mxu0 0.0
    %203 = vmatpush2.msra.mxu0 0.0
    %204 = vmatprep.subr.mxu0 0.0
    %205 = vmatpush2.msra.mxu0 0.0
    %206 = vmatprep.subr.mxu0 0.0
    %207 = vmatpush2.msra.mxu0 0.0
    %208 = vmatprep.subr.mxu0 0.0
    %209 = vmatpush2.msra.mxu0 0.0
    %210 = vmatprep.subr.mxu0 0.0
    %211 = vmatpush2.msra.mxu0 0.0
    %212 = vmatprep.subr.mxu0 0.0
    %213 = vmatpush2.msra.mxu0 0.0
    %214 = vmatprep.subr.mxu0 0.0
    %215 = vmatpush2.msra.mxu0 0.0
    %216 = vmatprep.subr.mxu0 0.0
    %217 = vmatpush2.msra.mxu0 0.0
    %218 = vmatprep.subr.mxu0 0.0
    %219 = vmatpush2.msra.mxu0 0.0
    %220 = vmatprep.subr.mxu0 0.0
    %221 = vmatpush2.msra.mxu0 0.0
    %222 = vmatprep.subr.mxu0 0.0
    %223 = vmatpush2.msra.mxu0 0.0
    %224 = vmatprep.subr.mxu0 0.0
    %225 = vmatpush2.msra.mxu0 0.0
    %226 = vmatprep.subr.mxu0 0.0
    %227 = vmatpush2.msra.mxu0 0.0
    %228 = vmatprep.subr.mxu0 0.0
    %229 = vmatpush2.msra.mxu0 0.0
    %230 = vmatprep.subr.mxu0 0.0
    %231 = vmatpush2.msra.mxu0 0.0
    %232 = vmatprep.subr.mxu0 0.0
    %233 = vmatpush2.msra.mxu0 0.0
    %234 = vmatprep.mubr.f32.mxu0 0.0
    %235 = vmatmul.mubr.f32.gmra.mxu0 %v164
    %v236 = vpop.f32.mrf.mxu0
    %v237 = vadd.f32 %v160, %v236
    %v238 = vpop.f32.mrf.mxu0
    %239 = vdwg.mxu0
    %v240 = vmax.f32 %v237, 0.0
    %242 = vset.pattern.permute.xlu0 0
    %243 = vperm.xlu0 %242, %v156
    %v244 = vpop.permute.xlu0 %243
    %v247 = vsel %vm151, %v155, 0
    %vm249 = vcmask 1041408
    %v251 = vsel %vm249, %v240, 0
    %253 = vmatprep.subr.mxu0 0.0
    %254 = vmatpush1.msra.mxu0 0.0
    %255 = vmatprep.subr.mxu0 0.0
    %256 = vmatpush1.msra.mxu0 0.0
    %257 = vmatprep.subr.mxu0 0.0
    %258 = vmatpush1.msra.mxu0 0.0
    %259 = vmatprep.subr.mxu0 0.0
    %260 = vmatpush1.msra.mxu0 0.0
    %261 = vmatprep.subr.mxu0 0.0
    %262 = vmatpush1.msra.mxu0 0.0
    %263 = vmatprep.subr.mxu0 0.0
    %264 = vmatpush1.msra.mxu0 0.0
    %265 = vmatprep.subr.mxu0 0.0
    %266 = vmatpush1.msra.mxu0 0.0
    %267 = vmatprep.subr.mxu0 0.0
    %268 = vmatpush1.msra.mxu0 0.0
    %269 = vmatprep.subr.mxu0 0.0
    %270 = vmatpush1.msra.mxu0 0.0
    %271 = vmatprep.subr.mxu0 0.0
    %272 = vmatpush1.msra.mxu0 0.0
    %273 = vmatprep.subr.mxu0 0.0
    %274 = vmatpush1.msra.mxu0 0.0
    %275 = vmatprep.subr.mxu0 0.0
    %276 = vmatpush1.msra.mxu0 0.0
    %277 = vmatprep.subr.mxu0 0.0
    %278 = vmatpush1.msra.mxu0 0.0
    %279 = vmatprep.subr.mxu0 0.0
    %280 = vmatpush1.msra.mxu0 0.0
    %281 = vmatprep.subr.mxu0 0.0
    %282 = vmatpush1.msra.mxu0 0.0
    %283 = vmatprep.subr.mxu0 0.0
    %284 = vmatpush1.msra.mxu0 %v251
    %285 = vmatprep.subr.mxu0 0.0
    %286 = vmatpush2.msra.mxu0 0.0
    %287 = vmatprep.subr.mxu0 0.0
    %288 = vmatpush2.msra.mxu0 0.0
    %289 = vmatprep.subr.mxu0 0.0
    %290 = vmatpush2.msra.mxu0 0.0
    %291 = vmatprep.subr.mxu0 0.0
    %292 = vmatpush2.msra.mxu0 0.0
    %293 = vmatprep.subr.mxu0 0.0
    %294 = vmatpush2.msra.mxu0 0.0
    %295 = vmatprep.subr.mxu0 0.0
    %296 = vmatpush2.msra.mxu0 0.0
    %297 = vmatprep.subr.mxu0 0.0
    %298 = vmatpush2.msra.mxu0 0.0
    %299 = vmatprep.subr.mxu0 0.0
    %300 = vmatpush2.msra.mxu0 0.0
    %301 = vmatprep.subr.mxu0 0.0
    %302 = vmatpush2.msra.mxu0 0.0
    %303 = vmatprep.subr.mxu0 0.0
    %304 = vmatpush2.msra.mxu0 0.0
    %305 = vmatprep.subr.mxu0 0.0
    %306 = vmatpush2.msra.mxu0 0.0
    %307 = vmatprep.subr.mxu0 0.0
    %308 = vmatpush2.msra.mxu0 0.0
    %309 = vmatprep.subr.mxu0 0.0
    %310 = vmatpush2.msra.mxu0 0.0
    %311 = vmatprep.subr.mxu0 0.0
    %312 = vmatpush2.msra.mxu0 0.0
    %313 = vmatprep.subr.mxu0 0.0
    %314 = vmatpush2.msra.mxu0 0.0
    %315 = vmatprep.subr.mxu0 0.0
    %316 = vmatpush2.msra.mxu0 0.0
    %317 = vmatprep.mubr.f32.mxu0 0.0
    %318 = vmatmul.mubr.f32.gmra.mxu0 %v247
    %v319 = vpop.f32.mrf.mxu0
    %v320 = vadd.f32 %v244, %v319
    %v321 = vpop.f32.mrf.mxu0
    %322 = vdwg.mxu0
    %324 = vrot.lane.b32.xlu0 %v320, 126
    %v325 = vpop.permute.xlu0 %324
    %v327 = vadd.f32 %v320, %v325
    %v328 = vxor.u32 %v327, 2147483648
    %v329 = vmul.f32 %v328, 1.442695
    %v330 = vpow.pop %v329
    %v331 = vadd.f32 %v330, 1.0
    %v332 = vrcp.pop %v331
    %v333 = vmul.f32 1.0, %v332
    %v334 = vlaneseq
    %v335 = vshrl.u32 %v334, 7
    %v336 = vsub.s32 0, %v335
    %v337 = vrot.slane %v333, %v336
    %339 = vbcast.lane.b32.xlu0 %v337, 256
    %v340 = vpop.permute.xlu0 %339
    %v341 = vlaneseq
    %v342 = vshrl.u32 %v341, 7
    %v343 = vsub.s32 1, %v342
    %v344 = vrot.slane %v333, %v343
    %346 = vbcast.lane.b32.xlu0 %v344, 256
    %v347 = vpop.permute.xlu0 %346
    %v348 = vlaneseq
    %v349 = vshrl.u32 %v348, 7
    %v350 = vsub.s32 2, %v349
    %v351 = vrot.slane %v333, %v350
    %353 = vbcast.lane.b32.xlu0 %v351, 256
    %v354 = vpop.permute.xlu0 %353
    %v355 = vlaneseq
    %v356 = vshrl.u32 %v355, 7
    %v357 = vsub.s32 3, %v356
    %v358 = vrot.slane %v333, %v357
    %360 = vbcast.lane.b32.xlu0 %v358, 256
    %v361 = vpop.permute.xlu0 %360
    %v362 = vlaneseq
    %v363 = vshrl.u32 %v362, 7
    %v364 = vsub.s32 4, %v363
    %v365 = vrot.slane %v333, %v364
    %367 = vbcast.lane.b32.xlu0 %v365, 256
    %v368 = vpop.permute.xlu0 %367
    %v369 = vlaneseq
    %v370 = vshrl.u32 %v369, 7
    %v371 = vsub.s32 5, %v370
    %v372 = vrot.slane %v333, %v371
    %374 = vbcast.lane.b32.xlu0 %v372, 256
    %v375 = vpop.permute.xlu0 %374
    %v376 = vmul.f32 %v21, %v340
    %v377 = vmul.f32 %v22, %v347
    %v378 = vmul.f32 %v23, %v354
    %v379 = vmul.f32 %v24, %v361
    %v380 = vmul.f32 %v25, %v368
    %v381 = vmul.f32 %v26, %v375
    %v382 = vsel %vm27, %v376, -inf
    %v383 = vsel %vm27, %v377, -inf
    %v384 = vsel %vm27, %v378, -inf
    %v385 = vsel %vm27, %v379, -inf
    %v386 = vsel %vm27, %v380, -inf
    %v387 = vmax.f32 %v382, %v386
    %v388 = vsel %vm27, %v381, -inf
    %v389 = vmax.f32 %v383, %v388
    %v390 = vmax.f32 %v387, %v389
    %v391 = vmax.f32 %v384, %v385
    %v392 = vmax.f32 %v390, %v391
    %v393 = vsel %vm27, %v376, 0.0
    %v394 = vsel %vm27, %v377, 0.0
    %v395 = vadd.f32 %v393, %v394
    %v396 = vsel %vm27, %v378, 0.0
    %v397 = vadd.f32 %v395, %v396
    %v398 = vsel %vm27, %v379, 0.0
    %v399 = vadd.f32 %v397, %v398
    %v400 = vsel %vm27, %v380, 0.0
    %v401 = vadd.f32 %v399, %v400
    %v402 = vsel %vm27, %v381, 0.0
    %v403 = vadd.f32 %v401, %v402
    %v404 = vrcp.pop 6.0
    %v405 = vmul.f32 %v403, %v404
    %407 = vrot.lane.b32.xlu0 %v405, 64
    %v408 = vpop.permute.xlu0 %407
    %vm410 = vcmask 523264
    %v411 = vsel %vm410, %v392, %v408
    %v412 = vld [vmem:[%s2] sm:$0xff]
    %v413 = vld [vmem:[%s2 + $0x8] sm:$0xff]
    %v414 = vld [vmem:[%s2 + $0x10] sm:$0xff]
    %v415 = vld [vmem:[%s2 + $0x18] sm:$0xff]
    %v416 = vld [vmem:[%s2 + $0x20] sm:$0xff]
    %v417 = vld [vmem:[%s2 + $0x28] sm:$0xff]
    %v418 = vld [vmem:[%s2 + $0x30] sm:$0xff]
    %v419 = vld [vmem:[%s2 + $0x38] sm:$0xff]
    %v420 = vld [vmem:[%s2 + $0x40] sm:$0xff]
    %v421 = vld [vmem:[%s2 + $0x48] sm:$0xff]
    %v422 = vld [vmem:[%s2 + $0x50] sm:$0xff]
    %v423 = vld [vmem:[%s2 + $0x58] sm:$0xff]
    %v424 = vld [vmem:[%s2 + $0x60] sm:$0xff]
    %v425 = vld [vmem:[%s2 + $0x68] sm:$0xff]
    %v426 = vld [vmem:[%s2 + $0x70] sm:$0xff]
    %v427 = vld [vmem:[%s2 + $0x78] sm:$0xff]
    %428 = vmatprep.subr.mxu0 0.0
    %429 = vmatpush1.msra.mxu0 %v427
    %430 = vmatprep.subr.mxu0 0.0
    %431 = vmatpush1.msra.mxu0 %v426
    %432 = vmatprep.subr.mxu0 0.0
    %433 = vmatpush1.msra.mxu0 %v425
    %434 = vmatprep.subr.mxu0 0.0
    %435 = vmatpush1.msra.mxu0 %v424
    %436 = vmatprep.subr.mxu0 0.0
    %437 = vmatpush1.msra.mxu0 %v423
    %438 = vmatprep.subr.mxu0 0.0
    %439 = vmatpush1.msra.mxu0 %v422
    %440 = vmatprep.subr.mxu0 0.0
    %441 = vmatpush1.msra.mxu0 %v421
    %442 = vmatprep.subr.mxu0 0.0
    %443 = vmatpush1.msra.mxu0 %v420
    %444 = vmatprep.subr.mxu0 0.0
    %445 = vmatpush1.msra.mxu0 %v419
    %446 = vmatprep.subr.mxu0 0.0
    %447 = vmatpush1.msra.mxu0 %v418
    %448 = vmatprep.subr.mxu0 0.0
    %449 = vmatpush1.msra.mxu0 %v417
    %450 = vmatprep.subr.mxu0 0.0
    %451 = vmatpush1.msra.mxu0 %v416
    %452 = vmatprep.subr.mxu0 0.0
    %453 = vmatpush1.msra.mxu0 %v415
    %454 = vmatprep.subr.mxu0 0.0
    %455 = vmatpush1.msra.mxu0 %v414
    %456 = vmatprep.subr.mxu0 0.0
    %457 = vmatpush1.msra.mxu0 %v413
    %458 = vmatprep.subr.mxu0 0.0
    %459 = vmatpush1.msra.mxu0 %v412
    %460 = vmatprep.subr.mxu0 0.0
    %461 = vmatpush2.msra.mxu0 0.0
    %462 = vmatprep.subr.mxu0 0.0
    %463 = vmatpush2.msra.mxu0 0.0
    %464 = vmatprep.subr.mxu0 0.0
    %465 = vmatpush2.msra.mxu0 0.0
    %466 = vmatprep.subr.mxu0 0.0
    %467 = vmatpush2.msra.mxu0 0.0
    %468 = vmatprep.subr.mxu0 0.0
    %469 = vmatpush2.msra.mxu0 0.0
    %470 = vmatprep.subr.mxu0 0.0
    %471 = vmatpush2.msra.mxu0 0.0
    %472 = vmatprep.subr.mxu0 0.0
    %473 = vmatpush2.msra.mxu0 0.0
    %474 = vmatprep.subr.mxu0 0.0
    %475 = vmatpush2.msra.mxu0 0.0
    %476 = vmatprep.subr.mxu0 0.0
    %477 = vmatpush2.msra.mxu0 0.0
    %478 = vmatprep.subr.mxu0 0.0
    %479 = vmatpush2.msra.mxu0 0.0
    %480 = vmatprep.subr.mxu0 0.0
    %481 = vmatpush2.msra.mxu0 0.0
    %482 = vmatprep.subr.mxu0 0.0
    %483 = vmatpush2.msra.mxu0 0.0
    %484 = vmatprep.subr.mxu0 0.0
    %485 = vmatpush2.msra.mxu0 0.0
    %486 = vmatprep.subr.mxu0 0.0
    %487 = vmatpush2.msra.mxu0 0.0
    %488 = vmatprep.subr.mxu0 0.0
    %489 = vmatpush2.msra.mxu0 0.0
    %490 = vmatprep.subr.mxu0 0.0
    %491 = vmatpush2.msra.mxu0 0.0
    %492 = vmatprep.mubr.f32.mxu0 0.0
    %493 = vmatmul.mubr.f32.gmra.mxu0 %v411
    %v494 = vpop.f32.mrf.mxu0
    %v495 = vadd.f32 0.0, %v494
    %v496 = vpop.f32.mrf.mxu0
    %497 = vdwg.mxu0
    %v498 = vmul.f32 %v376, %v495
    %v499 = vmul.f32 %v377, %v495
    %v500 = vmul.f32 %v378, %v495
    %v501 = vmul.f32 %v379, %v495
    %v502 = vmul.f32 %v380, %v495
    %v503 = vmul.f32 %v381, %v495
    %v504 = vld [vmem:[%s3] sm:$0xff]
    %v505 = vld [vmem:[%s3 + $0x8] sm:$0xff]
    %v506 = vld [vmem:[%s3 + $0x10] sm:$0xff]
    %v507 = vld [vmem:[%s3 + $0x18] sm:$0xff]
    %v508 = vld [vmem:[%s3 + $0x20] sm:$0xff]
    %v509 = vld [vmem:[%s3 + $0x28] sm:$0xff]
    %v510 = vld [vmem:[%s3 + $0x30] sm:$0xff]
    %v511 = vld [vmem:[%s3 + $0x38] sm:$0xff]
    %v512 = vld [vmem:[%s3 + $0x40] sm:$0xff]
    %v513 = vld [vmem:[%s3 + $0x48] sm:$0xff]
    %v514 = vld [vmem:[%s3 + $0x50] sm:$0xff]
    %v515 = vld [vmem:[%s3 + $0x58] sm:$0xff]
    %v516 = vld [vmem:[%s3 + $0x60] sm:$0xff]
    %v517 = vld [vmem:[%s3 + $0x68] sm:$0xff]
    %v518 = vld [vmem:[%s3 + $0x70] sm:$0xff]
    %v519 = vld [vmem:[%s3 + $0x78] sm:$0xff]
    %v520 = vld [vmem:[%s3 + $0x80] sm:$0xff]
    %v521 = vld [vmem:[%s3 + $0x88] sm:$0xff]
    %v522 = vld [vmem:[%s3 + $0x90] sm:$0xff]
    %v523 = vld [vmem:[%s3 + $0x98] sm:$0xff]
    %v524 = vld [vmem:[%s3 + $0xa0] sm:$0xff]
    %v525 = vld [vmem:[%s3 + $0xa8] sm:$0xff]
    %v526 = vld [vmem:[%s3 + $0xb0] sm:$0xff]
    %v527 = vld [vmem:[%s3 + $0xb8] sm:$0xff]
    %v528 = vld [vmem:[%s3 + $0xc0] sm:$0xff]
    %v529 = vld [vmem:[%s3 + $0xc8] sm:$0xff]
    %v530 = vld [vmem:[%s3 + $0xd0] sm:$0xff]
    %v531 = vld [vmem:[%s3 + $0xd8] sm:$0xff]
    %v532 = vld [vmem:[%s3 + $0xe0] sm:$0xff]
    %v533 = vld [vmem:[%s3 + $0xe8] sm:$0xff]
    %v534 = vld [vmem:[%s3 + $0xf0] sm:$0xff]
    %v535 = vld [vmem:[%s3 + $0xf8] sm:$0xff]
    %v536 = vld [vmem:[%s3 + $0x100] sm:$0xff]
    %v537 = vld [vmem:[%s3 + $0x108] sm:$0xff]
    %v538 = vld [vmem:[%s3 + $0x110] sm:$0xff]
    %v539 = vld [vmem:[%s3 + $0x118] sm:$0xff]
    %v540 = vld [vmem:[%s3 + $0x120] sm:$0xff]
    %v541 = vld [vmem:[%s3 + $0x128] sm:$0xff]
    %v542 = vld [vmem:[%s3 + $0x130] sm:$0xff]
    %v543 = vld [vmem:[%s3 + $0x138] sm:$0xff]
    %v544 = vld [vmem:[%s3 + $0x140] sm:$0xff]
    %v545 = vld [vmem:[%s3 + $0x148] sm:$0xff]
    %v546 = vld [vmem:[%s3 + $0x150] sm:$0xff]
    %v547 = vld [vmem:[%s3 + $0x158] sm:$0xff]
    %v548 = vld [vmem:[%s3 + $0x160] sm:$0xff]
    %v549 = vld [vmem:[%s3 + $0x168] sm:$0xff]
    %v550 = vld [vmem:[%s3 + $0x170] sm:$0xff]
    %v551 = vld [vmem:[%s3 + $0x178] sm:$0xff]
    %v553 = vsel %vm410, %v498, 0
    %555 = vmatprep.subr.mxu0 0.0
    %556 = vmatpush1.msra.mxu0 0.0
    %557 = vmatprep.subr.mxu0 0.0
    %558 = vmatpush1.msra.mxu0 0.0
    %559 = vmatprep.subr.mxu0 0.0
    %560 = vmatpush1.msra.mxu0 0.0
    %561 = vmatprep.subr.mxu0 0.0
    %562 = vmatpush1.msra.mxu0 0.0
    %563 = vmatprep.subr.mxu0 0.0
    %564 = vmatpush1.msra.mxu0 0.0
    %565 = vmatprep.subr.mxu0 0.0
    %566 = vmatpush1.msra.mxu0 0.0
    %567 = vmatprep.subr.mxu0 0.0
    %568 = vmatpush1.msra.mxu0 0.0
    %569 = vmatprep.subr.mxu0 0.0
    %570 = vmatpush1.msra.mxu0 0.0
    %571 = vmatprep.subr.mxu0 0.0
    %572 = vmatpush1.msra.mxu0 %v511
    %573 = vmatprep.subr.mxu0 0.0
    %574 = vmatpush1.msra.mxu0 %v510
    %575 = vmatprep.subr.mxu0 0.0
    %576 = vmatpush1.msra.mxu0 %v509
    %577 = vmatprep.subr.mxu0 0.0
    %578 = vmatpush1.msra.mxu0 %v508
    %579 = vmatprep.subr.mxu0 0.0
    %580 = vmatpush1.msra.mxu0 %v507
    %581 = vmatprep.subr.mxu0 0.0
    %582 = vmatpush1.msra.mxu0 %v506
    %583 = vmatprep.subr.mxu0 0.0
    %584 = vmatpush1.msra.mxu0 %v505
    %585 = vmatprep.subr.mxu0 0.0
    %586 = vmatpush1.msra.mxu0 %v504
    %587 = vmatprep.subr.mxu0 0.0
    %588 = vmatpush2.msra.mxu0 0.0
    %589 = vmatprep.subr.mxu0 0.0
    %590 = vmatpush2.msra.mxu0 0.0
    %591 = vmatprep.subr.mxu0 0.0
    %592 = vmatpush2.msra.mxu0 0.0
    %593 = vmatprep.subr.mxu0 0.0
    %594 = vmatpush2.msra.mxu0 0.0
    %595 = vmatprep.subr.mxu0 0.0
    %596 = vmatpush2.msra.mxu0 0.0
    %597 = vmatprep.subr.mxu0 0.0
    %598 = vmatpush2.msra.mxu0 0.0
    %599 = vmatprep.subr.mxu0 0.0
    %600 = vmatpush2.msra.mxu0 0.0
    %601 = vmatprep.subr.mxu0 0.0
    %602 = vmatpush2.msra.mxu0 0.0
    %603 = vmatprep.subr.mxu0 0.0
    %604 = vmatpush2.msra.mxu0 0.0
    %605 = vmatprep.subr.mxu0 0.0
    %606 = vmatpush2.msra.mxu0 0.0
    %607 = vmatprep.subr.mxu0 0.0
    %608 = vmatpush2.msra.mxu0 0.0
    %609 = vmatprep.subr.mxu0 0.0
    %610 = vmatpush2.msra.mxu0 0.0
    %611 = vmatprep.subr.mxu0 0.0
    %612 = vmatpush2.msra.mxu0 0.0
    %613 = vmatprep.subr.mxu0 0.0
    %614 = vmatpush2.msra.mxu0 0.0
    %615 = vmatprep.subr.mxu0 0.0
    %616 = vmatpush2.msra.mxu0 0.0
    %617 = vmatprep.subr.mxu0 0.0
    %618 = vmatpush2.msra.mxu0 0.0
    %619 = vmatprep.mubr.f32.mxu0 0.0
    %620 = vmatmul.mubr.f32.gmra.mxu0 %v553
    %v621 = vpop.f32.mrf.mxu0
    %v622 = vadd.f32 0.0, %v621
    %v623 = vpop.f32.mrf.mxu0
    %624 = vdwg.mxu0
    %v626 = vsel %vm410, %v499, 0
    %628 = vmatprep.subr.mxu0 0.0
    %629 = vmatpush1.msra.mxu0 0.0
    %630 = vmatprep.subr.mxu0 0.0
    %631 = vmatpush1.msra.mxu0 0.0
    %632 = vmatprep.subr.mxu0 0.0
    %633 = vmatpush1.msra.mxu0 0.0
    %634 = vmatprep.subr.mxu0 0.0
    %635 = vmatpush1.msra.mxu0 0.0
    %636 = vmatprep.subr.mxu0 0.0
    %637 = vmatpush1.msra.mxu0 0.0
    %638 = vmatprep.subr.mxu0 0.0
    %639 = vmatpush1.msra.mxu0 0.0
    %640 = vmatprep.subr.mxu0 0.0
    %641 = vmatpush1.msra.mxu0 0.0
    %642 = vmatprep.subr.mxu0 0.0
    %643 = vmatpush1.msra.mxu0 0.0
    %644 = vmatprep.subr.mxu0 0.0
    %645 = vmatpush1.msra.mxu0 %v519
    %646 = vmatprep.subr.mxu0 0.0
    %647 = vmatpush1.msra.mxu0 %v518
    %648 = vmatprep.subr.mxu0 0.0
    %649 = vmatpush1.msra.mxu0 %v517
    %650 = vmatprep.subr.mxu0 0.0
    %651 = vmatpush1.msra.mxu0 %v516
    %652 = vmatprep.subr.mxu0 0.0
    %653 = vmatpush1.msra.mxu0 %v515
    %654 = vmatprep.subr.mxu0 0.0
    %655 = vmatpush1.msra.mxu0 %v514
    %656 = vmatprep.subr.mxu0 0.0
    %657 = vmatpush1.msra.mxu0 %v513
    %658 = vmatprep.subr.mxu0 0.0
    %659 = vmatpush1.msra.mxu0 %v512
    %660 = vmatprep.subr.mxu0 0.0
    %661 = vmatpush2.msra.mxu0 0.0
    %662 = vmatprep.subr.mxu0 0.0
    %663 = vmatpush2.msra.mxu0 0.0
    %664 = vmatprep.subr.mxu0 0.0
    %665 = vmatpush2.msra.mxu0 0.0
    %666 = vmatprep.subr.mxu0 0.0
    %667 = vmatpush2.msra.mxu0 0.0
    %668 = vmatprep.subr.mxu0 0.0
    %669 = vmatpush2.msra.mxu0 0.0
    %670 = vmatprep.subr.mxu0 0.0
    %671 = vmatpush2.msra.mxu0 0.0
    %672 = vmatprep.subr.mxu0 0.0
    %673 = vmatpush2.msra.mxu0 0.0
    %674 = vmatprep.subr.mxu0 0.0
    %675 = vmatpush2.msra.mxu0 0.0
    %676 = vmatprep.subr.mxu0 0.0
    %677 = vmatpush2.msra.mxu0 0.0
    %678 = vmatprep.subr.mxu0 0.0
    %679 = vmatpush2.msra.mxu0 0.0
    %680 = vmatprep.subr.mxu0 0.0
    %681 = vmatpush2.msra.mxu0 0.0
    %682 = vmatprep.subr.mxu0 0.0
    %683 = vmatpush2.msra.mxu0 0.0
    %684 = vmatprep.subr.mxu0 0.0
    %685 = vmatpush2.msra.mxu0 0.0
    %686 = vmatprep.subr.mxu0 0.0
    %687 = vmatpush2.msra.mxu0 0.0
    %688 = vmatprep.subr.mxu0 0.0
    %689 = vmatpush2.msra.mxu0 0.0
    %690 = vmatprep.subr.mxu0 0.0
    %691 = vmatpush2.msra.mxu0 0.0
    %692 = vmatprep.mubr.f32.mxu0 0.0
    %693 = vmatmul.mubr.f32.gmra.mxu0 %v626
    %v694 = vpop.f32.mrf.mxu0
    %v695 = vadd.f32 0.0, %v694
    %v696 = vpop.f32.mrf.mxu0
    %697 = vdwg.mxu0
    %v699 = vsel %vm410, %v500, 0
    %701 = vmatprep.subr.mxu0 0.0
    %702 = vmatpush1.msra.mxu0 0.0
    %703 = vmatprep.subr.mxu0 0.0
    %704 = vmatpush1.msra.mxu0 0.0
    %705 = vmatprep.subr.mxu0 0.0
    %706 = vmatpush1.msra.mxu0 0.0
    %707 = vmatprep.subr.mxu0 0.0
    %708 = vmatpush1.msra.mxu0 0.0
    %709 = vmatprep.subr.mxu0 0.0
    %710 = vmatpush1.msra.mxu0 0.0
    %711 = vmatprep.subr.mxu0 0.0
    %712 = vmatpush1.msra.mxu0 0.0
    %713 = vmatprep.subr.mxu0 0.0
    %714 = vmatpush1.msra.mxu0 0.0
    %715 = vmatprep.subr.mxu0 0.0
    %716 = vmatpush1.msra.mxu0 0.0
    %717 = vmatprep.subr.mxu0 0.0
    %718 = vmatpush1.msra.mxu0 %v527
    %719 = vmatprep.subr.mxu0 0.0
    %720 = vmatpush1.msra.mxu0 %v526
    %721 = vmatprep.subr.mxu0 0.0
    %722 = vmatpush1.msra.mxu0 %v525
    %723 = vmatprep.subr.mxu0 0.0
    %724 = vmatpush1.msra.mxu0 %v524
    %725 = vmatprep.subr.mxu0 0.0
    %726 = vmatpush1.msra.mxu0 %v523
    %727 = vmatprep.subr.mxu0 0.0
    %728 = vmatpush1.msra.mxu0 %v522
    %729 = vmatprep.subr.mxu0 0.0
    %730 = vmatpush1.msra.mxu0 %v521
    %731 = vmatprep.subr.mxu0 0.0
    %732 = vmatpush1.msra.mxu0 %v520
    %733 = vmatprep.subr.mxu0 0.0
    %734 = vmatpush2.msra.mxu0 0.0
    %735 = vmatprep.subr.mxu0 0.0
    %736 = vmatpush2.msra.mxu0 0.0
    %737 = vmatprep.subr.mxu0 0.0
    %738 = vmatpush2.msra.mxu0 0.0
    %739 = vmatprep.subr.mxu0 0.0
    %740 = vmatpush2.msra.mxu0 0.0
    %741 = vmatprep.subr.mxu0 0.0
    %742 = vmatpush2.msra.mxu0 0.0
    %743 = vmatprep.subr.mxu0 0.0
    %744 = vmatpush2.msra.mxu0 0.0
    %745 = vmatprep.subr.mxu0 0.0
    %746 = vmatpush2.msra.mxu0 0.0
    %747 = vmatprep.subr.mxu0 0.0
    %748 = vmatpush2.msra.mxu0 0.0
    %749 = vmatprep.subr.mxu0 0.0
    %750 = vmatpush2.msra.mxu0 0.0
    %751 = vmatprep.subr.mxu0 0.0
    %752 = vmatpush2.msra.mxu0 0.0
    %753 = vmatprep.subr.mxu0 0.0
    %754 = vmatpush2.msra.mxu0 0.0
    %755 = vmatprep.subr.mxu0 0.0
    %756 = vmatpush2.msra.mxu0 0.0
    %757 = vmatprep.subr.mxu0 0.0
    %758 = vmatpush2.msra.mxu0 0.0
    %759 = vmatprep.subr.mxu0 0.0
    %760 = vmatpush2.msra.mxu0 0.0
    %761 = vmatprep.subr.mxu0 0.0
    %762 = vmatpush2.msra.mxu0 0.0
    %763 = vmatprep.subr.mxu0 0.0
    %764 = vmatpush2.msra.mxu0 0.0
    %765 = vmatprep.mubr.f32.mxu0 0.0
    %766 = vmatmul.mubr.f32.gmra.mxu0 %v699
    %v767 = vpop.f32.mrf.mxu0
    %v768 = vadd.f32 0.0, %v767
    %v769 = vpop.f32.mrf.mxu0
    %770 = vdwg.mxu0
    %v772 = vsel %vm410, %v501, 0
    %774 = vmatprep.subr.mxu0 0.0
    %775 = vmatpush1.msra.mxu0 0.0
    %776 = vmatprep.subr.mxu0 0.0
    %777 = vmatpush1.msra.mxu0 0.0
    %778 = vmatprep.subr.mxu0 0.0
    %779 = vmatpush1.msra.mxu0 0.0
    %780 = vmatprep.subr.mxu0 0.0
    %781 = vmatpush1.msra.mxu0 0.0
    %782 = vmatprep.subr.mxu0 0.0
    %783 = vmatpush1.msra.mxu0 0.0
    %784 = vmatprep.subr.mxu0 0.0
    %785 = vmatpush1.msra.mxu0 0.0
    %786 = vmatprep.subr.mxu0 0.0
    %787 = vmatpush1.msra.mxu0 0.0
    %788 = vmatprep.subr.mxu0 0.0
    %789 = vmatpush1.msra.mxu0 0.0
    %790 = vmatprep.subr.mxu0 0.0
    %791 = vmatpush1.msra.mxu0 %v535
    %792 = vmatprep.subr.mxu0 0.0
    %793 = vmatpush1.msra.mxu0 %v534
    %794 = vmatprep.subr.mxu0 0.0
    %795 = vmatpush1.msra.mxu0 %v533
    %796 = vmatprep.subr.mxu0 0.0
    %797 = vmatpush1.msra.mxu0 %v532
    %798 = vmatprep.subr.mxu0 0.0
    %799 = vmatpush1.msra.mxu0 %v531
    %800 = vmatprep.subr.mxu0 0.0
    %801 = vmatpush1.msra.mxu0 %v530
    %802 = vmatprep.subr.mxu0 0.0
    %803 = vmatpush1.msra.mxu0 %v529
    %804 = vmatprep.subr.mxu0 0.0
    %805 = vmatpush1.msra.mxu0 %v528
    %806 = vmatprep.subr.mxu0 0.0
    %807 = vmatpush2.msra.mxu0 0.0
    %808 = vmatprep.subr.mxu0 0.0
    %809 = vmatpush2.msra.mxu0 0.0
    %810 = vmatprep.subr.mxu0 0.0
    %811 = vmatpush2.msra.mxu0 0.0
    %812 = vmatprep.subr.mxu0 0.0
    %813 = vmatpush2.msra.mxu0 0.0
    %814 = vmatprep.subr.mxu0 0.0
    %815 = vmatpush2.msra.mxu0 0.0
    %816 = vmatprep.subr.mxu0 0.0
    %817 = vmatpush2.msra.mxu0 0.0
    %818 = vmatprep.subr.mxu0 0.0
    %819 = vmatpush2.msra.mxu0 0.0
    %820 = vmatprep.subr.mxu0 0.0
    %821 = vmatpush2.msra.mxu0 0.0
    %822 = vmatprep.subr.mxu0 0.0
    %823 = vmatpush2.msra.mxu0 0.0
    %824 = vmatprep.subr.mxu0 0.0
    %825 = vmatpush2.msra.mxu0 0.0
    %826 = vmatprep.subr.mxu0 0.0
    %827 = vmatpush2.msra.mxu0 0.0
    %828 = vmatprep.subr.mxu0 0.0
    %829 = vmatpush2.msra.mxu0 0.0
    %830 = vmatprep.subr.mxu0 0.0
    %831 = vmatpush2.msra.mxu0 0.0
    %832 = vmatprep.subr.mxu0 0.0
    %833 = vmatpush2.msra.mxu0 0.0
    %834 = vmatprep.subr.mxu0 0.0
    %835 = vmatpush2.msra.mxu0 0.0
    %836 = vmatprep.subr.mxu0 0.0
    %837 = vmatpush2.msra.mxu0 0.0
    %838 = vmatprep.mubr.f32.mxu0 0.0
    %839 = vmatmul.mubr.f32.gmra.mxu0 %v772
    %v840 = vpop.f32.mrf.mxu0
    %v841 = vadd.f32 0.0, %v840
    %v842 = vpop.f32.mrf.mxu0
    %843 = vdwg.mxu0
    %v845 = vsel %vm410, %v502, 0
    %847 = vmatprep.subr.mxu0 0.0
    %848 = vmatpush1.msra.mxu0 0.0
    %849 = vmatprep.subr.mxu0 0.0
    %850 = vmatpush1.msra.mxu0 0.0
    %851 = vmatprep.subr.mxu0 0.0
    %852 = vmatpush1.msra.mxu0 0.0
    %853 = vmatprep.subr.mxu0 0.0
    %854 = vmatpush1.msra.mxu0 0.0
    %855 = vmatprep.subr.mxu0 0.0
    %856 = vmatpush1.msra.mxu0 0.0
    %857 = vmatprep.subr.mxu0 0.0
    %858 = vmatpush1.msra.mxu0 0.0
    %859 = vmatprep.subr.mxu0 0.0
    %860 = vmatpush1.msra.mxu0 0.0
    %861 = vmatprep.subr.mxu0 0.0
    %862 = vmatpush1.msra.mxu0 0.0
    %863 = vmatprep.subr.mxu0 0.0
    %864 = vmatpush1.msra.mxu0 %v543
    %865 = vmatprep.subr.mxu0 0.0
    %866 = vmatpush1.msra.mxu0 %v542
    %867 = vmatprep.subr.mxu0 0.0
    %868 = vmatpush1.msra.mxu0 %v541
    %869 = vmatprep.subr.mxu0 0.0
    %870 = vmatpush1.msra.mxu0 %v540
    %871 = vmatprep.subr.mxu0 0.0
    %872 = vmatpush1.msra.mxu0 %v539
    %873 = vmatprep.subr.mxu0 0.0
    %874 = vmatpush1.msra.mxu0 %v538
    %875 = vmatprep.subr.mxu0 0.0
    %876 = vmatpush1.msra.mxu0 %v537
    %877 = vmatprep.subr.mxu0 0.0
    %878 = vmatpush1.msra.mxu0 %v536
    %879 = vmatprep.subr.mxu0 0.0
    %880 = vmatpush2.msra.mxu0 0.0
    %881 = vmatprep.subr.mxu0 0.0
    %882 = vmatpush2.msra.mxu0 0.0
    %883 = vmatprep.subr.mxu0 0.0
    %884 = vmatpush2.msra.mxu0 0.0
    %885 = vmatprep.subr.mxu0 0.0
    %886 = vmatpush2.msra.mxu0 0.0
    %887 = vmatprep.subr.mxu0 0.0
    %888 = vmatpush2.msra.mxu0 0.0
    %889 = vmatprep.subr.mxu0 0.0
    %890 = vmatpush2.msra.mxu0 0.0
    %891 = vmatprep.subr.mxu0 0.0
    %892 = vmatpush2.msra.mxu0 0.0
    %893 = vmatprep.subr.mxu0 0.0
    %894 = vmatpush2.msra.mxu0 0.0
    %895 = vmatprep.subr.mxu0 0.0
    %896 = vmatpush2.msra.mxu0 0.0
    %897 = vmatprep.subr.mxu0 0.0
    %898 = vmatpush2.msra.mxu0 0.0
    %899 = vmatprep.subr.mxu0 0.0
    %900 = vmatpush2.msra.mxu0 0.0
    %901 = vmatprep.subr.mxu0 0.0
    %902 = vmatpush2.msra.mxu0 0.0
    %903 = vmatprep.subr.mxu0 0.0
    %904 = vmatpush2.msra.mxu0 0.0
    %905 = vmatprep.subr.mxu0 0.0
    %906 = vmatpush2.msra.mxu0 0.0
    %907 = vmatprep.subr.mxu0 0.0
    %908 = vmatpush2.msra.mxu0 0.0
    %909 = vmatprep.subr.mxu0 0.0
    %910 = vmatpush2.msra.mxu0 0.0
    %911 = vmatprep.mubr.f32.mxu0 0.0
    %912 = vmatmul.mubr.f32.gmra.mxu0 %v845
    %v913 = vpop.f32.mrf.mxu0
    %v914 = vadd.f32 0.0, %v913
    %v915 = vpop.f32.mrf.mxu0
    %916 = vdwg.mxu0
    %v918 = vsel %vm410, %v503, 0
    %920 = vmatprep.subr.mxu0 0.0
    %921 = vmatpush1.msra.mxu0 0.0
    %922 = vmatprep.subr.mxu0 0.0
    %923 = vmatpush1.msra.mxu0 0.0
    %924 = vmatprep.subr.mxu0 0.0
    %925 = vmatpush1.msra.mxu0 0.0
    %926 = vmatprep.subr.mxu0 0.0
    %927 = vmatpush1.msra.mxu0 0.0
    %928 = vmatprep.subr.mxu0 0.0
    %929 = vmatpush1.msra.mxu0 0.0
    %930 = vmatprep.subr.mxu0 0.0
    %931 = vmatpush1.msra.mxu0 0.0
    %932 = vmatprep.subr.mxu0 0.0
    %933 = vmatpush1.msra.mxu0 0.0
    %934 = vmatprep.subr.mxu0 0.0
    %935 = vmatpush1.msra.mxu0 0.0
    %936 = vmatprep.subr.mxu0 0.0
    %937 = vmatpush1.msra.mxu0 %v551
    %938 = vmatprep.subr.mxu0 0.0
    %939 = vmatpush1.msra.mxu0 %v550
    %940 = vmatprep.subr.mxu0 0.0
    %941 = vmatpush1.msra.mxu0 %v549
    %942 = vmatprep.subr.mxu0 0.0
    %943 = vmatpush1.msra.mxu0 %v548
    %944 = vmatprep.subr.mxu0 0.0
    %945 = vmatpush1.msra.mxu0 %v547
    %946 = vmatprep.subr.mxu0 0.0
    %947 = vmatpush1.msra.mxu0 %v546
    %948 = vmatprep.subr.mxu0 0.0
    %949 = vmatpush1.msra.mxu0 %v545
    %950 = vmatprep.subr.mxu0 0.0
    %951 = vmatpush1.msra.mxu0 %v544
    %952 = vmatprep.subr.mxu0 0.0
    %953 = vmatpush2.msra.mxu0 0.0
    %954 = vmatprep.subr.mxu0 0.0
    %955 = vmatpush2.msra.mxu0 0.0
    %956 = vmatprep.subr.mxu0 0.0
    %957 = vmatpush2.msra.mxu0 0.0
    %958 = vmatprep.subr.mxu0 0.0
    %959 = vmatpush2.msra.mxu0 0.0
    %960 = vmatprep.subr.mxu0 0.0
    %961 = vmatpush2.msra.mxu0 0.0
    %962 = vmatprep.subr.mxu0 0.0
    %963 = vmatpush2.msra.mxu0 0.0
    %964 = vmatprep.subr.mxu0 0.0
    %965 = vmatpush2.msra.mxu0 0.0
    %966 = vmatprep.subr.mxu0 0.0
    %967 = vmatpush2.msra.mxu0 0.0
    %968 = vmatprep.subr.mxu0 0.0
    %969 = vmatpush2.msra.mxu0 0.0
    %970 = vmatprep.subr.mxu0 0.0
    %971 = vmatpush2.msra.mxu0 0.0
    %972 = vmatprep.subr.mxu0 0.0
    %973 = vmatpush2.msra.mxu0 0.0
    %974 = vmatprep.subr.mxu0 0.0
    %975 = vmatpush2.msra.mxu0 0.0
    %976 = vmatprep.subr.mxu0 0.0
    %977 = vmatpush2.msra.mxu0 0.0
    %978 = vmatprep.subr.mxu0 0.0
    %979 = vmatpush2.msra.mxu0 0.0
    %980 = vmatprep.subr.mxu0 0.0
    %981 = vmatpush2.msra.mxu0 0.0
    %982 = vmatprep.subr.mxu0 0.0
    %983 = vmatpush2.msra.mxu0 0.0
    %984 = vmatprep.mubr.f32.mxu0 0.0
    %985 = vmatmul.mubr.f32.gmra.mxu0 %v918
    %v986 = vpop.f32.mrf.mxu0
    %v987 = vadd.f32 0.0, %v986
    %v988 = vpop.f32.mrf.mxu0
    %989 = vdwg.mxu0
    %vm990 = vcmask 254976
    %v991 = vsel %vm990, %v622, 0.0
    %v992 = vsel %vm990, %v695, 0.0
    %v993 = vadd.f32 %v991, %v992
    %v994 = vsel %vm990, %v768, 0.0
    %v995 = vadd.f32 %v993, %v994
    %v996 = vsel %vm990, %v841, 0.0
    %v997 = vadd.f32 %v995, %v996
    %v998 = vsel %vm990, %v914, 0.0
    %v999 = vadd.f32 %v997, %v998
    %v1000 = vsel %vm990, %v987, 0.0
    %v1001 = vadd.f32 %v999, %v1000
    %v1002 = vld [vmem:[%s4 + $0x20] sm:$0xff]
    %v1003 = vld [vmem:[%s4 + $0x28] sm:$0x1]
    %v1004 = vld [vmem:[%s4 + $0x30] sm:$0xff]
    %v1005 = vld [vmem:[%s4 + $0x38] sm:$0xff]
    %v1006 = vld [vmem:[%s4 + $0x40] sm:$0xff]
    %v1007 = vld [vmem:[%s4 + $0x48] sm:$0xff]
    %v1008 = vld [vmem:[%s4 + $0x50] sm:$0x1]
    %v1009 = vld [vmem:[%s4 + $0x58] sm:$0xff]
    %v1010 = vld [vmem:[%s4 + $0x60] sm:$0xff]
    %v1011 = vld [vmem:[%s4 + $0x68] sm:$0xff]
    %v1012 = vld [vmem:[%s4 + $0x70] sm:$0xff]
    %v1013 = vld [vmem:[%s4 + $0x78] sm:$0x1]
    %v1014 = vld [vmem:[%s1] sm:$0x3]
    %vm1015 = vcmask 64512
    %v1017 = vsel %vm1015, %v1014, 0
    %1019 = vmatprep.subr.mxu0 0.0
    %1020 = vmatpush1.msra.mxu0 0.0
    %1021 = vmatprep.subr.mxu0 0.0
    %1022 = vmatpush1.msra.mxu0 0.0
    %1023 = vmatprep.subr.mxu0 0.0
    %1024 = vmatpush1.msra.mxu0 0.0
    %1025 = vmatprep.subr.mxu0 0.0
    %1026 = vmatpush1.msra.mxu0 0.0
    %1027 = vmatprep.subr.mxu0 0.0
    %1028 = vmatpush1.msra.mxu0 0.0
    %1029 = vmatprep.subr.mxu0 0.0
    %1030 = vmatpush1.msra.mxu0 0.0
    %1031 = vmatprep.subr.mxu0 0.0
    %1032 = vmatpush1.msra.mxu0 0.0
    %1033 = vmatprep.subr.mxu0 0.0
    %1034 = vmatpush1.msra.mxu0 0.0
    %1035 = vmatprep.subr.mxu0 0.0
    %1036 = vmatpush1.msra.mxu0 0.0
    %1037 = vmatprep.subr.mxu0 0.0
    %1038 = vmatpush1.msra.mxu0 0.0
    %1039 = vmatprep.subr.mxu0 0.0
    %1040 = vmatpush1.msra.mxu0 0.0
    %1041 = vmatprep.subr.mxu0 0.0
    %1042 = vmatpush1.msra.mxu0 0.0
    %1043 = vmatprep.subr.mxu0 0.0
    %1044 = vmatpush1.msra.mxu0 0.0
    %1045 = vmatprep.subr.mxu0 0.0
    %1046 = vmatpush1.msra.mxu0 0.0
    %1047 = vmatprep.subr.mxu0 0.0
    %1048 = vmatpush1.msra.mxu0 0.0
    %1049 = vmatprep.subr.mxu0 0.0
    %1050 = vmatpush1.msra.mxu0 %v1002
    %1051 = vmatprep.subr.mxu0 0.0
    %1052 = vmatpush2.msra.mxu0 0.0
    %1053 = vmatprep.subr.mxu0 0.0
    %1054 = vmatpush2.msra.mxu0 0.0
    %1055 = vmatprep.subr.mxu0 0.0
    %1056 = vmatpush2.msra.mxu0 0.0
    %1057 = vmatprep.subr.mxu0 0.0
    %1058 = vmatpush2.msra.mxu0 0.0
    %1059 = vmatprep.subr.mxu0 0.0
    %1060 = vmatpush2.msra.mxu0 0.0
    %1061 = vmatprep.subr.mxu0 0.0
    %1062 = vmatpush2.msra.mxu0 0.0
    %1063 = vmatprep.subr.mxu0 0.0
    %1064 = vmatpush2.msra.mxu0 0.0
    %1065 = vmatprep.subr.mxu0 0.0
    %1066 = vmatpush2.msra.mxu0 0.0
    %1067 = vmatprep.subr.mxu0 0.0
    %1068 = vmatpush2.msra.mxu0 0.0
    %1069 = vmatprep.subr.mxu0 0.0
    %1070 = vmatpush2.msra.mxu0 0.0
    %1071 = vmatprep.subr.mxu0 0.0
    %1072 = vmatpush2.msra.mxu0 0.0
    %1073 = vmatprep.subr.mxu0 0.0
    %1074 = vmatpush2.msra.mxu0 0.0
    %1075 = vmatprep.subr.mxu0 0.0
    %1076 = vmatpush2.msra.mxu0 0.0
    %1077 = vmatprep.subr.mxu0 0.0
    %1078 = vmatpush2.msra.mxu0 0.0
    %1079 = vmatprep.subr.mxu0 0.0
    %1080 = vmatpush2.msra.mxu0 0.0
    %1081 = vmatprep.subr.mxu0 0.0
    %1082 = vmatpush2.msra.mxu0 0.0
    %1083 = vmatprep.mubr.f32.mxu0 0.0
    %1084 = vmatmul.mubr.f32.gmra.mxu0 %v1017
    %v1085 = vpop.f32.mrf.mxu0
    %v1086 = vadd.f32 0.0, %v1085
    %v1087 = vpop.f32.mrf.mxu0
    %1088 = vdwg.mxu0
    %v1089 = vadd.f32 %v1001, %v1086
    %v1090 = vlaneseq
    %v1091 = vshrl.u32 %v1090, 7
    %v1092 = vsub.s32 0, %v1091
    %v1093 = vrot.slane %v1003, %v1092
    %v1094 = vadd.f32 %v1089, %v1093
    %v1095 = vmax.f32 %v1094, 0.0
    %v1096 = vlaneseq
    %v1097 = vshrl.u32 %v1096, 7
    %v1098 = vsub.s32 0, %v1097
    %v1099 = vrot.slane %v1008, %v1098
    %vm1100 = vcmask 261120
    %v1102 = vsel %vm1100, %v1095, 0
    %1104 = vmatprep.subr.mxu0 0.0
    %1105 = vmatpush1.msra.mxu0 0.0
    %1106 = vmatprep.subr.mxu0 0.0
    %1107 = vmatpush1.msra.mxu0 0.0
    %1108 = vmatprep.subr.mxu0 0.0
    %1109 = vmatpush1.msra.mxu0 0.0
    %1110 = vmatprep.subr.mxu0 0.0
    %1111 = vmatpush1.msra.mxu0 0.0
    %1112 = vmatprep.subr.mxu0 0.0
    %1113 = vmatpush1.msra.mxu0 0.0
    %1114 = vmatprep.subr.mxu0 0.0
    %1115 = vmatpush1.msra.mxu0 0.0
    %1116 = vmatprep.subr.mxu0 0.0
    %1117 = vmatpush1.msra.mxu0 0.0
    %1118 = vmatprep.subr.mxu0 0.0
    %1119 = vmatpush1.msra.mxu0 0.0
    %1120 = vmatprep.subr.mxu0 0.0
    %1121 = vmatpush1.msra.mxu0 0.0
    %1122 = vmatprep.subr.mxu0 0.0
    %1123 = vmatpush1.msra.mxu0 0.0
    %1124 = vmatprep.subr.mxu0 0.0
    %1125 = vmatpush1.msra.mxu0 0.0
    %1126 = vmatprep.subr.mxu0 0.0
    %1127 = vmatpush1.msra.mxu0 0.0
    %1128 = vmatprep.subr.mxu0 0.0
    %1129 = vmatpush1.msra.mxu0 %v1007
    %1130 = vmatprep.subr.mxu0 0.0
    %1131 = vmatpush1.msra.mxu0 %v1006
    %1132 = vmatprep.subr.mxu0 0.0
    %1133 = vmatpush1.msra.mxu0 %v1005
    %1134 = vmatprep.subr.mxu0 0.0
    %1135 = vmatpush1.msra.mxu0 %v1004
    %1136 = vmatprep.subr.mxu0 0.0
    %1137 = vmatpush2.msra.mxu0 0.0
    %1138 = vmatprep.subr.mxu0 0.0
    %1139 = vmatpush2.msra.mxu0 0.0
    %1140 = vmatprep.subr.mxu0 0.0
    %1141 = vmatpush2.msra.mxu0 0.0
    %1142 = vmatprep.subr.mxu0 0.0
    %1143 = vmatpush2.msra.mxu0 0.0
    %1144 = vmatprep.subr.mxu0 0.0
    %1145 = vmatpush2.msra.mxu0 0.0
    %1146 = vmatprep.subr.mxu0 0.0
    %1147 = vmatpush2.msra.mxu0 0.0
    %1148 = vmatprep.subr.mxu0 0.0
    %1149 = vmatpush2.msra.mxu0 0.0
    %1150 = vmatprep.subr.mxu0 0.0
    %1151 = vmatpush2.msra.mxu0 0.0
    %1152 = vmatprep.subr.mxu0 0.0
    %1153 = vmatpush2.msra.mxu0 0.0
    %1154 = vmatprep.subr.mxu0 0.0
    %1155 = vmatpush2.msra.mxu0 0.0
    %1156 = vmatprep.subr.mxu0 0.0
    %1157 = vmatpush2.msra.mxu0 0.0
    %1158 = vmatprep.subr.mxu0 0.0
    %1159 = vmatpush2.msra.mxu0 0.0
    %1160 = vmatprep.subr.mxu0 0.0
    %1161 = vmatpush2.msra.mxu0 0.0
    %1162 = vmatprep.subr.mxu0 0.0
    %1163 = vmatpush2.msra.mxu0 0.0
    %1164 = vmatprep.subr.mxu0 0.0
    %1165 = vmatpush2.msra.mxu0 0.0
    %1166 = vmatprep.subr.mxu0 0.0
    %1167 = vmatpush2.msra.mxu0 0.0
    %1168 = vmatprep.mubr.f32.mxu0 0.0
    %1169 = vmatmul.mubr.f32.gmra.mxu0 %v1102
    %v1170 = vpop.f32.mrf.mxu0
    %v1171 = vadd.f32 %v1099, %v1170
    %v1172 = vpop.f32.mrf.mxu0
    %1173 = vdwg.mxu0
    %v1174 = vmax.f32 %v1171, 0.0
    %v1175 = vlaneseq
    %v1176 = vshrl.u32 %v1175, 7
    %v1177 = vsub.s32 0, %v1176
    %v1178 = vrot.slane %v1013, %v1177
    %v1180 = vsel %vm1100, %v1174, 0
    %1182 = vmatprep.subr.mxu0 0.0
    %1183 = vmatpush1.msra.mxu0 0.0
    %1184 = vmatprep.subr.mxu0 0.0
    %1185 = vmatpush1.msra.mxu0 0.0
    %1186 = vmatprep.subr.mxu0 0.0
    %1187 = vmatpush1.msra.mxu0 0.0
    %1188 = vmatprep.subr.mxu0 0.0
    %1189 = vmatpush1.msra.mxu0 0.0
    %1190 = vmatprep.subr.mxu0 0.0
    %1191 = vmatpush1.msra.mxu0 0.0
    %1192 = vmatprep.subr.mxu0 0.0
    %1193 = vmatpush1.msra.mxu0 0.0
    %1194 = vmatprep.subr.mxu0 0.0
    %1195 = vmatpush1.msra.mxu0 0.0
    %1196 = vmatprep.subr.mxu0 0.0
    %1197 = vmatpush1.msra.mxu0 0.0
    %1198 = vmatprep.subr.mxu0 0.0
    %1199 = vmatpush1.msra.mxu0 0.0
    %1200 = vmatprep.subr.mxu0 0.0
    %1201 = vmatpush1.msra.mxu0 0.0
    %1202 = vmatprep.subr.mxu0 0.0
    %1203 = vmatpush1.msra.mxu0 0.0
    %1204 = vmatprep.subr.mxu0 0.0
    %1205 = vmatpush1.msra.mxu0 0.0
    %1206 = vmatprep.subr.mxu0 0.0
    %1207 = vmatpush1.msra.mxu0 %v1012
    %1208 = vmatprep.subr.mxu0 0.0
    %1209 = vmatpush1.msra.mxu0 %v1011
    %1210 = vmatprep.subr.mxu0 0.0
    %1211 = vmatpush1.msra.mxu0 %v1010
    %1212 = vmatprep.subr.mxu0 0.0
    %1213 = vmatpush1.msra.mxu0 %v1009
    %1214 = vmatprep.subr.mxu0 0.0
    %1215 = vmatpush2.msra.mxu0 0.0
    %1216 = vmatprep.subr.mxu0 0.0
    %1217 = vmatpush2.msra.mxu0 0.0
    %1218 = vmatprep.subr.mxu0 0.0
    %1219 = vmatpush2.msra.mxu0 0.0
    %1220 = vmatprep.subr.mxu0 0.0
    %1221 = vmatpush2.msra.mxu0 0.0
    %1222 = vmatprep.subr.mxu0 0.0
    %1223 = vmatpush2.msra.mxu0 0.0
    %1224 = vmatprep.subr.mxu0 0.0
    %1225 = vmatpush2.msra.mxu0 0.0
    %1226 = vmatprep.subr.mxu0 0.0
    %1227 = vmatpush2.msra.mxu0 0.0
    %1228 = vmatprep.subr.mxu0 0.0
    %1229 = vmatpush2.msra.mxu0 0.0
    %1230 = vmatprep.subr.mxu0 0.0
    %1231 = vmatpush2.msra.mxu0 0.0
    %1232 = vmatprep.subr.mxu0 0.0
    %1233 = vmatpush2.msra.mxu0 0.0
    %1234 = vmatprep.subr.mxu0 0.0
    %1235 = vmatpush2.msra.mxu0 0.0
    %1236 = vmatprep.subr.mxu0 0.0
    %1237 = vmatpush2.msra.mxu0 0.0
    %1238 = vmatprep.subr.mxu0 0.0
    %1239 = vmatpush2.msra.mxu0 0.0
    %1240 = vmatprep.subr.mxu0 0.0
    %1241 = vmatpush2.msra.mxu0 0.0
    %1242 = vmatprep.subr.mxu0 0.0
    %1243 = vmatpush2.msra.mxu0 0.0
    %1244 = vmatprep.subr.mxu0 0.0
    %1245 = vmatpush2.msra.mxu0 0.0
    %1246 = vmatprep.mubr.f32.mxu0 0.0
    %1247 = vmatmul.mubr.f32.gmra.mxu0 %v1180
    %v1248 = vpop.f32.mrf.mxu0
    %v1249 = vadd.f32 %v1178, %v1248
    %v1250 = vpop.f32.mrf.mxu0
    %1251 = vdwg.mxu0
    %v1252 = vtanh.pop %v1249
    %vm1253 = vcmask 25600
    %1254 = vst.msk [vmem:[#allocation2] sm:$0x3] %vm1253, %v1252
    // Predicated region
    $region22: #{forward.1} parent=1 // pred_check
      _
    $region23: #{forward.1} parent=1 // pred_check_branch
      %1256 = sbr.rel (0) target = $region25
    $region24: #{forward.1} parent=1 // pred_region
      %s1258 = ssub.s32 32, 32
      %1259 = vsyncadd [#allocation3], %s1258
      %s1261 = sshll.u32 [#allocation2], 4
      %s1262 = int_to_ptr.vmem [resolvable:$true] %s1261
      %1264 = dma.vmem_to_hbm [thread:$0]  %s1262, 32, %s5, [#allocation3]
    $region25: #{forward.1} parent=1 // pred_fallthru
      _
    // Predicated region
    $region26: #{forward.1} parent=1 // pred_check
      _
    $region27: #{forward.1} parent=1 // pred_check_branch
      %1266 = sbr.rel (0) target = $region29
    $region28: #{forward.1} parent=1 // pred_region
      %1267 = dma.done [#allocation3], 32
    $region29: #{forward.1} parent=1 // pred_fallthru
      _
    %1268 = vsyncpa [#allocation3], 1

</llo_original>
